<compile_context>
chip_gen: v6e
topology: v6e:2x2x1
jax: 0.10.0
libtpu: 0.0.40
codegen_flags: <defaults>
</compile_context>

<pallas_src>
import functools
import math

import numpy as np

import jax
import jax.numpy as jnp
from jax import lax
from jax.experimental import pallas as pl
from jax.experimental.pallas import tpu as pltpu


_LANE = 128
_SUBLANE = 8


def _round_up(x, m):
    return ((x + m - 1) // m) * m


def _roll_rows(x, shift):
    """jnp.roll(x, shift, axis=0) with a static shift (XLU sublane rotate)."""
    n = x.shape[0]
    shift = shift % n
    if shift == 0:
        return x
    return pltpu.roll(x, shift, axis=0)


def token_conv_kernel(x_ref, m_ref, w_ref, o_ref, *, L):
    # x_ref: (TM, C_in)    flat rows = whole length-L sequences
    # m_ref: (TM, 2)       f32 boundary masks: [:,0] = (t==0), [:,1] = (t==L-1)
    # w_ref: (3, C_in, TN) tap-major weight slab (output-column tile j)
    # o_ref: (TM, TN)
    x = x_ref[...]

    # Circular neighbours inside each length-L sequence: block-level sublane
    # rolls (XLU slot, essentially free) + a boundary select on the first /
    # last row of each sequence.
    prev_in = _roll_rows(x, 1)          # x[r - 1]
    prev_wrap = _roll_rows(x, 1 - L)    # x[r + L - 1]   (wrap for t == 0)
    next_in = _roll_rows(x, -1)         # x[r + 1]
    next_wrap = _roll_rows(x, L - 1)    # x[r - L + 1]   (wrap for t == L-1)

    m = m_ref[...]
    x_prev = jnp.where(m[:, 0:1] > 0.5, prev_wrap, prev_in)
    x_next = jnp.where(m[:, 1:2] > 0.5, next_wrap, next_in)

    # Three accumulating MXU dots (K = C_in is tiny; the kernel is HBM-bound).
    # TODO(synk): on v5e/v6e (sequential MRF result FIFO) a single fused
    # (TM, 3*C_in) x (3*C_in, TN) dot would save two result drains; kept as
    # three dots to avoid a lane-axis concatenate — it hides under the output
    # DMA anyway.
    acc = jnp.dot(x_prev, w_ref[0], preferred_element_type=jnp.float32)
    acc += jnp.dot(x, w_ref[1], preferred_element_type=jnp.float32)
    acc += jnp.dot(x_next, w_ref[2], preferred_element_type=jnp.float32)
    o_ref[...] = acc.astype(o_ref.dtype)


def _prepare_weight(weight, lane=_LANE):
    """(C_out, C_in, 3) PyTorch Conv1d layout -> (3, C_in, Cp).

    Only lane-pad when C_out >= 128 (padding a 32-wide output to 128 would
    quadruple the HBM write stream of a memory-bound kernel). Hoist/cache this
    outside any training loop — it depends only on the weights.
    """
    C_out, C_in, K = weight.shape
    assert K == 3
    Cp = C_out if C_out < lane else _round_up(C_out, lane)
    w = jnp.transpose(weight, (2, 1, 0))                  # (3, C_in, C_out)
    if Cp != C_out:
        w = jnp.pad(w, ((0, 0), (0, 0), (0, Cp - C_out)))
    return w, Cp


def _vmem_capacity_bytes():
    try:
        return int(pltpu.get_tpu_info().vmem_capacity_bytes)
    except Exception:
        return 64 << 20          # v7x per-core VMEM — smallest in the fleet


def _choose_tiling(B, L, C_in, Cp, *, in_bytes, out_bytes,
                   target_rows, block_budget_bytes):
    """Pick (sequences per row block, output column tile)."""
    # Whole-sequence row blocks with sublane-aligned (multiple-of-8) height.
    tb_unit = _SUBLANE // math.gcd(L, _SUBLANE)

    # Output column tile: full width when modest, else a 128-multiple divisor.
    if Cp <= 512:
        tn = Cp
    else:
        tn = 512
        while Cp % tn:           # Cp is a multiple of 128 here -> terminates
            tn -= 128

    def blk_bytes(rows):
        x_b = rows * _round_up(C_in, _LANE) * in_bytes
        o_b = rows * _round_up(tn, _LANE) * out_bytes
        m_b = rows * _LANE * 4                     # boundary-mask tile
        return x_b + o_b + m_b

    # Largest whole-sequence block under the row / VMEM targets, but keep at
    # least two row blocks when B allows it (v7x megacore sharding).
    max_tb = max(tb_unit, _round_up(B, tb_unit))
    if B >= 2 * tb_unit:
        max_tb = min(max_tb, (B // (2 * tb_unit)) * tb_unit)
    tb = tb_unit
    while (tb + tb_unit <= max_tb
           and (tb + tb_unit) * L <= target_rows
           and blk_bytes((tb + tb_unit) * L) <= block_budget_bytes):
        tb += tb_unit
    # Prefer a block count that divides B (avoids padded batch rows).
    for cand in range(tb, tb_unit - 1, -tb_unit):
        if B % cand == 0:
            tb = cand
            break
    # TODO(synk): a single sequence longer than the VMEM budget would need
    # within-sequence row tiling with a 1-row halo; not implemented.
    return tb, tn


def token_embedding_forward(x, weight, *, out_dtype=None,
                            target_rows=4096, block_budget_bytes=14 << 20):
    """x: (B, L, C_in); weight: (C_out, C_in, 3) (PyTorch Conv1d layout)."""
    B, L, C_in = x.shape
    C_out = weight.shape[0]
    out_dtype = x.dtype if out_dtype is None else jnp.dtype(out_dtype)

    w_stk, Cp = _prepare_weight(weight)
    tb, TN = _choose_tiling(
        B, L, C_in, Cp,
        in_bytes=x.dtype.itemsize,
        out_bytes=np.dtype(out_dtype).itemsize,
        target_rows=target_rows,
        block_budget_bytes=block_budget_bytes)
    TM = tb * L
    B_pad = _round_up(B, tb)

    x2d = x.reshape(B * L, C_in)              # contiguous -> free
    if B_pad != B:
        x2d = jnp.pad(x2d, ((0, (B_pad - B) * L), (0, 0)))

    # Boundary masks — identical for every block since each block holds whole,
    # identically-aligned sequences. Baked at trace time, no in-kernel iota/mod.
    t = np.arange(TM) % L
    masks = jnp.asarray(np.stack([t == 0, t == L - 1], axis=1),
                        dtype=jnp.float32)

    n_rows = B_pad // tb
    n_cols = Cp // TN
    grid = (n_rows, n_cols)

    # VMEM limit derived from the real double-buffered footprint.
    blk = (TM * _round_up(C_in, _LANE) * x.dtype.itemsize
           + TM * _round_up(TN, _LANE) * np.dtype(out_dtype).itemsize
           + TM * _LANE * 4)
    w_bytes = 3 * _round_up(C_in, _SUBLANE) * Cp * weight.dtype.itemsize
    need = 2 * blk + 2 * w_bytes + (2 << 20)
    vmem_limit = int(min(max(need, 32 << 20),
                         _vmem_capacity_bytes() - (8 << 20)))

    out = pl.pallas_call(
        functools.partial(token_conv_kernel, L=L),
        out_shape=jax.ShapeDtypeStruct((B_pad * L, Cp), out_dtype),
        grid=grid,
        in_specs=[
            pl.BlockSpec((TM, C_in), lambda i, j: (i, 0)),       # x rows
            pl.BlockSpec((TM, 2), lambda i, j: (0, 0)),          # boundary masks
            pl.BlockSpec((3, C_in, TN), lambda i, j: (0, 0, j)),  # weight slab
        ],
        out_specs=pl.BlockSpec((TM, TN), lambda i, j: (i, j)),
        compiler_params=pltpu.CompilerParams(
            dimension_semantics=("parallel", "parallel"),
            vmem_limit_bytes=vmem_limit,
        ),
    )(x2d, masks, w_stk)

    # Drop padded batch rows / padded output lanes (no-ops when unpadded).
    return out[:B * L, :C_out].reshape(B, L, C_out)


def init_weight(key, input_size, d_model):
    # nn.init.kaiming_normal_(w, mode='fan_in', nonlinearity='leaky_relu')
    kernel_size = 3
    a = 0.01
    gain = math.sqrt(2.0 / (1.0 + a * a))
    fan_in = input_size * kernel_size
    std = gain / math.sqrt(fan_in)
    return std * jax.random.normal(
        key, (d_model, input_size, kernel_size), dtype=jnp.float32)


def reference_forward(x, weight):
    """Independent reference: circular pad + VALID conv via lax (NCL layout)."""
    x_ncl = jnp.transpose(x, (0, 2, 1))                       # (B, C_in, L)
    x_pad = jnp.pad(x_ncl, ((0, 0), (0, 0), (1, 1)), mode="wrap")
    y = lax.conv_general_dilated(
        x_pad, weight, window_strides=(1,), padding="VALID",
        dimension_numbers=("NCH", "OIH", "NCH"))              # (B, C_out, L)
    return jnp.transpose(y, (0, 2, 1))                        # (B, L, C_out)


if __name__ == "__main__":
    B, L, input_size, d_model = 2, 8, 4, 32

    key = jax.random.PRNGKey(0)
    k_x, k_w = jax.random.split(key)
    x = jax.random.normal(k_x, (B, L, input_size), dtype=jnp.float32)
    weight = init_weight(k_w, input_size, d_model)

    ref = reference_forward(x, weight)

    # f32 path — matches the PyTorch module's numerics.
    fwd = jax.jit(token_embedding_forward)
    out = jax.block_until_ready(fwd(x, weight))
    assert out.shape == (B, L, d_model)
    assert jnp.allclose(out, ref, atol=1e-5, rtol=1e-5), float(
        jnp.max(jnp.abs(out - ref)))

    # bf16 in/out path (f32 accumulation) — halves HBM traffic on v6e/v7x.
    fwd_bf16 = jax.jit(
        functools.partial(token_embedding_forward, out_dtype=jnp.bfloat16))
    out_bf16 = jax.block_until_ready(
        fwd_bf16(x.astype(jnp.bfloat16), weight.astype(jnp.bfloat16)))
    assert out_bf16.dtype == jnp.bfloat16
    assert jnp.allclose(out_bf16.astype(jnp.float32), ref,
                        atol=1e-1, rtol=1e-1), float(
        jnp.max(jnp.abs(out_bf16.astype(jnp.float32) - ref)))

    print("KERNEL_OK")
</pallas_src>

<mosaic_0001>
module attributes {stable_mosaic.version = 11 : i64} {
  func.func @token_conv_kernel(%arg0: i32, %arg1: i32, %arg2: memref<8x4xf32, #tpu.memory_space<vmem>>, %arg3: memref<8x2xf32, #tpu.memory_space<vmem>>, %arg4: memref<3x4x32xf32, #tpu.memory_space<vmem>>, %arg5: memref<8x32xf32, #tpu.memory_space<vmem>>) attributes {dimension_semantics = [#tpu.dimension_semantics<parallel>, #tpu.dimension_semantics<parallel>], iteration_bounds = array<i64: 2, 1>, scalar_prefetch = 0 : i64, scratch_operands = 0 : i64, tpu.core_type = #tpu.core_type<tc>, window_params = [{transform_indices = @transform_0, window_bounds = array<i64: 8, 4>}, {pipeline_mode = #tpu.pipeline_mode<synchronous>, transform_indices = @transform_1, window_bounds = array<i64: 8, 2>}, {transform_indices = @transform_2, window_bounds = array<i64: 3, 4, 32>}, {transform_indices = @transform_3, window_bounds = array<i64: 8, 32>}]} {
    %c0 = arith.constant 0 : index
    %c0_0 = arith.constant 0 : index
    %0 = vector.load %arg2[%c0, %c0_0] : memref<8x4xf32, #tpu.memory_space<vmem>>, vector<8x4xf32>
    %c1_i32 = arith.constant 1 : i32
    %1 = tpu.dynamic_rotate %0 by %c1_i32 dim 0 : vector<8x4xf32>, i32 -> vector<8x4xf32>
    %c1_i32_1 = arith.constant 1 : i32
    %2 = tpu.dynamic_rotate %0 by %c1_i32_1 dim 0 : vector<8x4xf32>, i32 -> vector<8x4xf32>
    %c7_i32 = arith.constant 7 : i32
    %3 = tpu.dynamic_rotate %0 by %c7_i32 dim 0 : vector<8x4xf32>, i32 -> vector<8x4xf32>
    %c7_i32_2 = arith.constant 7 : i32
    %4 = tpu.dynamic_rotate %0 by %c7_i32_2 dim 0 : vector<8x4xf32>, i32 -> vector<8x4xf32>
    %c0_3 = arith.constant 0 : index
    %c0_4 = arith.constant 0 : index
    %5 = vector.load %arg3[%c0_3, %c0_4] : memref<8x2xf32, #tpu.memory_space<vmem>>, vector<8x2xf32>
    %6 = vector.extract_strided_slice %5 {offsets = [0, 0], sizes = [8, 1], strides = [1, 1]} : vector<8x2xf32> to vector<8x1xf32>
    %cst = arith.constant 5.000000e-01 : f32
    %7 = vector.broadcast %cst : f32 to vector<8x1xf32>
    %8 = arith.cmpf ogt, %6, %7 : vector<8x1xf32>
    %9 = vector.shape_cast %8 : vector<8x1xi1> to vector<8x1xi1>
    %10 = vector.broadcast %9 : vector<8x1xi1> to vector<8x4xi1>
    %11 = arith.select %10, %2, %1 : vector<8x4xi1>, vector<8x4xf32>
    %12 = vector.extract_strided_slice %5 {offsets = [0, 1], sizes = [8, 1], strides = [1, 1]} : vector<8x2xf32> to vector<8x1xf32>
    %cst_5 = arith.constant 5.000000e-01 : f32
    %13 = vector.broadcast %cst_5 : f32 to vector<8x1xf32>
    %14 = arith.cmpf ogt, %12, %13 : vector<8x1xf32>
    %15 = vector.shape_cast %14 : vector<8x1xi1> to vector<8x1xi1>
    %16 = vector.broadcast %15 : vector<8x1xi1> to vector<8x4xi1>
    %17 = arith.select %16, %4, %3 : vector<8x4xi1>, vector<8x4xf32>
    %c0_6 = arith.constant 0 : index
    %c0_7 = arith.constant 0 : index
    %c0_8 = arith.constant 0 : index
    %18 = vector.load %arg4[%c0_6, %c0_7, %c0_8] : memref<3x4x32xf32, #tpu.memory_space<vmem>>, vector<1x4x32xf32>
    %19 = vector.shape_cast %18 : vector<1x4x32xf32> to vector<4x32xf32>
    %cst_9 = arith.constant dense<0.000000e+00> : vector<8x32xf32>
    %20 = tpu.matmul %11, %19, %cst_9 {dimension_numbers = #tpu.dot_dimension_numbers<[1], [0], [0], [1], [0, 0, 1, 1], [], []>} : vector<8x4xf32>, vector<4x32xf32>, vector<8x32xf32> -> vector<8x32xf32>
    %c1 = arith.constant 1 : index
    %c0_10 = arith.constant 0 : index
    %c0_11 = arith.constant 0 : index
    %21 = vector.load %arg4[%c1, %c0_10, %c0_11] : memref<3x4x32xf32, #tpu.memory_space<vmem>>, vector<1x4x32xf32>
    %22 = vector.shape_cast %21 : vector<1x4x32xf32> to vector<4x32xf32>
    %cst_12 = arith.constant dense<0.000000e+00> : vector<8x32xf32>
    %23 = tpu.matmul %0, %22, %cst_12 {dimension_numbers = #tpu.dot_dimension_numbers<[1], [0], [0], [1], [0, 0, 1, 1], [], []>} : vector<8x4xf32>, vector<4x32xf32>, vector<8x32xf32> -> vector<8x32xf32>
    %24 = arith.addf %20, %23 : vector<8x32xf32>
    %c2 = arith.constant 2 : index
    %c0_13 = arith.constant 0 : index
    %c0_14 = arith.constant 0 : index
    %25 = vector.load %arg4[%c2, %c0_13, %c0_14] : memref<3x4x32xf32, #tpu.memory_space<vmem>>, vector<1x4x32xf32>
    %26 = vector.shape_cast %25 : vector<1x4x32xf32> to vector<4x32xf32>
    %cst_15 = arith.constant dense<0.000000e+00> : vector<8x32xf32>
    %27 = tpu.matmul %17, %26, %cst_15 {dimension_numbers = #tpu.dot_dimension_numbers<[1], [0], [0], [1], [0, 0, 1, 1], [], []>} : vector<8x4xf32>, vector<4x32xf32>, vector<8x32xf32> -> vector<8x32xf32>
    %28 = arith.addf %24, %27 : vector<8x32xf32>
    %c0_16 = arith.constant 0 : index
    %c0_17 = arith.constant 0 : index
    %29 = vector.load %arg5[%c0_16, %c0_17] : memref<8x32xf32, #tpu.memory_space<vmem>>, vector<8x32xf32>
    tpu.vector_store %arg5[%c0_16, %c0_17], %28 {strides = array<i32>} : memref<8x32xf32, #tpu.memory_space<vmem>>, vector<8x32xf32>,
    return
  }
  func.func @transform_0(%arg0: i32, %arg1: i32) -> (i32, i32) {
    %c0_i32 = arith.constant 0 : i32
    %c0_i32_0 = arith.constant 0 : i32
    return %arg0, %c0_i32 : i32, i32
  }
  func.func @transform_1(%arg0: i32, %arg1: i32) -> (i32, i32) {
    %c0_i32 = arith.constant 0 : i32
    %c0_i32_0 = arith.constant 0 : i32
    %c0_i32_1 = arith.constant 0 : i32
    return %c0_i32, %c0_i32_0 : i32, i32
  }
  func.func @transform_2(%arg0: i32, %arg1: i32) -> (i32, i32, i32) {
    %c0_i32 = arith.constant 0 : i32
    %c0_i32_0 = arith.constant 0 : i32
    %c0_i32_1 = arith.constant 0 : i32
    return %c0_i32, %c0_i32_0, %arg1 : i32, i32, i32
  }
  func.func @transform_3(%arg0: i32, %arg1: i32) -> (i32, i32) {
    %c0_i32 = arith.constant 0 : i32
    return %arg0, %arg1 : i32, i32
  }
}

</mosaic_0001>

<llo_original>
// kernel: token_embedding_forward.1
$region0: #{token_embedding_forward.1}
  #allocation0 [shape = 'u32[]', space=smem, size = 0x4, offset = 0x4, fixed_abs, tag = 'smem constant byte address 0x4 - core index']
  #allocation1 [shape = 'u32[144,128]{1,0:T(1,128)}', space=vmem, size = 0x12000, scoped, tag = 'internal scratch']
  %s0 = inlined_call_operand.vmem [shape: f32[16,4], index: 0, kind: input, shape index: {}]
  %s1 = inlined_call_operand.vmem [shape: f32[8,2], index: 1, kind: input, shape index: {}]
  %s2 = inlined_call_operand.vmem [shape: f32[3,4,32], index: 2, kind: input, shape index: {}]
  %s3 = inlined_call_operand.hbm [shape: f32[16,32], index: 3, kind: output, shape index: {}]
  %s4 = sld [smem:[#allocation0]]
  $region45: #{token_embedding_forward.1} parent=0
    _
  %s6 = ssub.s32 1, %s4
  %s7 = scalar_select 0, %s6, %s4
  $region1: #{token_embedding_forward.1} parent=0
    #allocation2 [shape = 'u8[8192]{0}', space=vmem, size = 0x2000, scoped, tag = 'output window, operand 0']
    #allocation3 [shape = 's32[2]{0}', space=sflag, size = 0x8, scoped, tag = 'scoped memory for token_embedding_forward.1']
    %8 = vsyncpa [#allocation3], 0
    %s9 = scalar_lea.sflag [#allocation3], 1
    %10 = vsyncpa %s9, 0
    loop: start=0, step=1, limit=4
    $region2: #{token_embedding_forward.1} parent=1 // loop_pre_header
      _
    $region3: #{token_embedding_forward.1} parent=1 // loop_header
      %s12 = sphi 0, %s16
      %p13 = scmp.ge.s32.totalorder %s12, 4
      %s19 = sphi 0, %s31
      %s20 = sphi 0, %s27
      %s21 = sphi 0, %s19
      %s22 = sphi 0, %s20
      %s23 = sphi 0, %s21
      %s24 = sphi 0, %s22
      %s34 = sphi 0, %s36
      %s37 = sphi 0, %s34
      %s38 = sphi 0, %s37
      %s54 = sphi 0, %s38
      %s58 = sphi 0, %s58
      %s60 = sphi 0, %s58
      %s61 = sphi 0, %s60
      %s75 = sphi 0, %s61
      %s81 = sphi 0, %s83
      %s84 = sphi 0, %s81
      %s85 = sphi 0, %s84
      %s101 = sphi 0, %s85
      %s109 = sphi 0, %s111
      %s112 = sphi 0, %s109
      %s113 = sphi 0, %s112
      %s129 = sphi 0, %s113
    $region4: #{token_embedding_forward.1} parent=1 // loop_header_branch
      %15 = sbr.rel (%p13) target = $region8
    $region5: #{token_embedding_forward.1} parent=1 // loop_body
      %s17 = ssub.s32 %s12, 1
      %s18 = ssub.s32 %s12, 2
      %s25 = sadd.s32 1, %s20
      %p26 = scmp.ge.s32.totalorder %s25, 1
      %s27 = scalar_select %p26, 0, %s25
      %s28 = sadd.s32 1, %s19
      %s29 = scalar_select %p26, %s28, %s19
      %p30 = scmp.ge.s32.totalorder %s29, 2
      %s31 = scalar_select %p30, 0, %s29
      %s32 = ssub.s32 %s19, %s31
      %p33 = scmp.eq.s32.totalorder %s32, 0
      %s35 = sadd.s32 %s34, 1
      %s36 = scalar_select %p33, %s34, %s35
      %p39 = pneg %p33
      %p40 = scmp.eq.s32.totalorder %s12, 1
      %p41 = por %p39, %p40
      %p42 = scmp.ne.s32.totalorder %s34, %s37
      %p43 = scmp.eq.s32.totalorder %s12, 0
      %p44 = por %p42, %p43
      %p45 = scmp.ne.s32.totalorder %s34, %s37
      %p46 = scmp.eq.s32.totalorder %s17, 1
      %p47 = por %p45, %p46
      %p48 = scmp.ne.s32.totalorder %s37, %s38
      %p49 = scmp.eq.s32.totalorder %s17, 0
      %p50 = por %p48, %p49
      %p51 = scmp.ne.s32.totalorder %s37, %s38
      %p52 = scmp.eq.s32.totalorder %s18, 1
      %p53 = por %p51, %p52
      %p55 = scmp.ne.s32.totalorder %s38, %s54
      %p56 = scmp.eq.s32.totalorder %s18, 0
      %p57 = por %p55, %p56
      %s59 = sadd.s32 %s58, 1
      %p62 = scmp.eq.s32.totalorder %s12, 1
      %p63 = scmp.ne.s32.totalorder %s58, %s60
      %p64 = scmp.eq.s32.totalorder %s12, 0
      %p65 = por %p63, %p64
      %p66 = scmp.ne.s32.totalorder %s58, %s60
      %p67 = scmp.eq.s32.totalorder %s17, 1
      %p68 = por %p66, %p67
      %p69 = scmp.ne.s32.totalorder %s60, %s61
      %p70 = scmp.eq.s32.totalorder %s17, 0
      %p71 = por %p69, %p70
      %p72 = scmp.ne.s32.totalorder %s60, %s61
      %p73 = scmp.eq.s32.totalorder %s18, 1
      %p74 = por %p72, %p73
      %p76 = scmp.ne.s32.totalorder %s61, %s75
      %p77 = scmp.eq.s32.totalorder %s18, 0
      %p78 = por %p76, %p77
      %s79 = ssub.s32 %s20, %s27
      %p80 = scmp.eq.s32.totalorder %s79, 0
      %s82 = sadd.s32 %s81, 1
      %s83 = scalar_select %p80, %s81, %s82
      %p86 = pneg %p80
      %p87 = scmp.eq.s32.totalorder %s12, 1
      %p88 = por %p86, %p87
      %p89 = scmp.ne.s32.totalorder %s81, %s84
      %p90 = scmp.eq.s32.totalorder %s12, 0
      %p91 = por %p89, %p90
      %p92 = scmp.ne.s32.totalorder %s81, %s84
      %p93 = scmp.eq.s32.totalorder %s17, 1
      %p94 = por %p92, %p93
      %p95 = scmp.ne.s32.totalorder %s84, %s85
      %p96 = scmp.eq.s32.totalorder %s17, 0
      %p97 = por %p95, %p96
      %p98 = scmp.ne.s32.totalorder %s84, %s85
      %p99 = scmp.eq.s32.totalorder %s18, 1
      %p100 = por %p98, %p99
      %p102 = scmp.ne.s32.totalorder %s85, %s101
      %p103 = scmp.eq.s32.totalorder %s18, 0
      %p104 = por %p102, %p103
      %s105 = ssub.s32 %s19, %s31
      %s106 = ssub.s32 %s20, %s27
      %s107 = sor.u32 %s105, %s106
      %p108 = scmp.eq.s32.totalorder %s107, 0
      %s110 = sadd.s32 %s109, 1
      %s111 = scalar_select %p108, %s109, %s110
      %p114 = pneg %p108
      %p115 = scmp.eq.s32.totalorder %s12, 1
      %p116 = por %p114, %p115
      %p117 = scmp.ne.s32.totalorder %s109, %s112
      %p118 = scmp.eq.s32.totalorder %s12, 0
      %p119 = por %p117, %p118
      %p120 = scmp.ne.s32.totalorder %s109, %s112
      %p121 = scmp.eq.s32.totalorder %s17, 1
      %p122 = por %p120, %p121
      %p123 = scmp.ne.s32.totalorder %s112, %s113
      %p124 = scmp.eq.s32.totalorder %s17, 0
      %p125 = por %p123, %p124
      %p126 = scmp.ne.s32.totalorder %s112, %s113
      %p127 = scmp.eq.s32.totalorder %s18, 1
      %p128 = por %p126, %p127
      %p130 = scmp.ne.s32.totalorder %s113, %s129
      %p131 = scmp.eq.s32.totalorder %s18, 0
      %p132 = por %p130, %p131
      %p133 = scmp.le.s32.totalorder 1, %s12
      %p134 = scmp.lt.s32.totalorder %s12, 3
      %p135 = pnand %p133, %p134
      %p136 = pneg %p135
      // Predicated region
      $region9: #{token_embedding_forward.1} parent=5 // pred_check
        _
      $region10: #{token_embedding_forward.1} parent=5 // pred_check_branch
        %138 = sbr.rel (%p135) target = $region12
      $region11: #{token_embedding_forward.1} parent=5 // pred_region
        %s139 = ssub.s32 %s12, 1
        // Predicated region
        $region13: #{token_embedding_forward.1} parent=11 // pred_check
          %p140 = pneg %p71
        $region14: #{token_embedding_forward.1} parent=11 // pred_check_branch
          %142 = sbr.rel (%p140) target = $region16
        $region15: #{token_embedding_forward.1} parent=11 // pred_region
          _
        $region16: #{token_embedding_forward.1} parent=11 // pred_fallthru
          _
        // Predicated region
        $region17: #{token_embedding_forward.1} parent=11 // pred_check
          %p143 = pneg %p97
        $region18: #{token_embedding_forward.1} parent=11 // pred_check_branch
          %145 = sbr.rel (%p143) target = $region20
        $region19: #{token_embedding_forward.1} parent=11 // pred_region
          %p146 = scmp.lt.s32.totalorder %s22, 0
          %s147 = scalar_select %p146, %s22, 0
          %s148 = smul.addr %s147, 4
          %s149 = scalar_lea.vmem %s2, %s148
        $region20: #{token_embedding_forward.1} parent=11 // pred_fallthru
          _
      $region12: #{token_embedding_forward.1} parent=5 // pred_fallthru
        _
      %p150 = scmp.lt.s32.totalorder %s12, 2
      // Predicated region
      $region21: #{token_embedding_forward.1} parent=5 // pred_check
        %p151 = pneg %p150
      $region22: #{token_embedding_forward.1} parent=5 // pred_check_branch
        %153 = sbr.rel (%p151) target = $region24
      $region23: #{token_embedding_forward.1} parent=5 // pred_region
        // Predicated region
        $region25: #{token_embedding_forward.1} parent=23 // pred_check
          %p154 = pneg %p44
        $region26: #{token_embedding_forward.1} parent=23 // pred_check_branch
          %156 = sbr.rel (%p154) target = $region28
        $region27: #{token_embedding_forward.1} parent=23 // pred_region
          %p157 = scmp.lt.s32.totalorder %s19, 1
          %s158 = scalar_select %p157, %s19, 1
          %s159 = smul.addr %s158, 8
          %s160 = scalar_lea.vmem %s0, %s159
        $region28: #{token_embedding_forward.1} parent=23 // pred_fallthru
          _
      $region24: #{token_embedding_forward.1} parent=5 // pred_fallthru
        _
      %p161 = scmp.le.s32.totalorder 1, %s12
      %p162 = scmp.lt.s32.totalorder %s12, 3
      %p163 = pnand %p161, %p162
      %p164 = pneg %p163
      // Predicated region
      $region29: #{token_embedding_forward.1} parent=5 // pred_check
        _
      $region30: #{token_embedding_forward.1} parent=5 // pred_check_branch
        %166 = sbr.rel (%p163) target = $region32
      $region31: #{token_embedding_forward.1} parent=5 // pred_region
        %s167 = ssub.s32 %s12, 1
        %p168 = scmp.lt.s32.totalorder %s21, 1
        %s169 = scalar_select %p168, %s21, 1
        %s170 = smul.addr %s169, 8
        %s171 = scalar_lea.vmem %s0, %s170
        %p172 = pneg %p50
        %p173 = pneg %p47
        %p174 = pneg %p71
        %p175 = pneg %p68
        %p176 = scmp.lt.s32.totalorder %s22, 0
        %s177 = scalar_select %p176, %s22, 0
        %s178 = smul.addr %s177, 4
        %s179 = scalar_lea.vmem %s2, %s178
        %p180 = pneg %p97
        %p181 = pneg %p94
        %p182 = pneg %p125
        %p183 = pneg %p122
        %s184 = sand.u32 %s112, 1
        %s185 = scalar_lea.sflag [#allocation3], %s184
        %s186 = sand.u32 %s112, 1
        %s187 = smul.addr %s186, 8
        %s188 = scalar_lea.vmem [#allocation2], %s187
        %p189 = scmp.lt.s32.totalorder %s21, 1
        %s190 = scalar_select %p189, %s21, 1
        %s191 = smul.addr %s190, 8
        %s192 = scalar_lea.vmem %s0, %s191
        %p193 = scmp.lt.s32.totalorder %s22, 0
        %s194 = scalar_select %p193, %s22, 0
        %s195 = smul.addr %s194, 4
        %s196 = scalar_lea.vmem %s2, %s195
        %v197 = vld [vmem:[%s192] sm:$0xff]
        %v198 = vrot.slane %v197, 7
        %v199 = vrot.slane %v197, 1
        %v200 = vld [vmem:[%s196] sm:$0xf]
        %s201 = scalar_lea.vmem %s196, 4
        %v202 = vld [vmem:[%s201] sm:$0xf]
        %vm203 = vcmask 31744
        %v205 = vsel %vm203, %v197, 0
        %vm207 = vcmask 1043456
        %v209 = vsel %vm207, %v202, 0
        %211 = vmatprep.subr.mxu0 0.0
        %212 = vmatpush1.msra.mxu0 0.0
        %213 = vmatprep.subr.mxu0 0.0
        %214 = vmatpush1.msra.mxu0 0.0
        %215 = vmatprep.subr.mxu0 0.0
        %216 = vmatpush1.msra.mxu0 0.0
        %217 = vmatprep.subr.mxu0 0.0
        %218 = vmatpush1.msra.mxu0 0.0
        %219 = vmatprep.subr.mxu0 0.0
        %220 = vmatpush1.msra.mxu0 0.0
        %221 = vmatprep.subr.mxu0 0.0
        %222 = vmatpush1.msra.mxu0 0.0
        %223 = vmatprep.subr.mxu0 0.0
        %224 = vmatpush1.msra.mxu0 0.0
        %225 = vmatprep.subr.mxu0 0.0
        %226 = vmatpush1.msra.mxu0 0.0
        %227 = vmatprep.subr.mxu0 0.0
        %228 = vmatpush1.msra.mxu0 0.0
        %229 = vmatprep.subr.mxu0 0.0
        %230 = vmatpush1.msra.mxu0 0.0
        %231 = vmatprep.subr.mxu0 0.0
        %232 = vmatpush1.msra.mxu0 0.0
        %233 = vmatprep.subr.mxu0 0.0
        %234 = vmatpush1.msra.mxu0 0.0
        %235 = vmatprep.subr.mxu0 0.0
        %236 = vmatpush1.msra.mxu0 0.0
        %237 = vmatprep.subr.mxu0 0.0
        %238 = vmatpush1.msra.mxu0 0.0
        %239 = vmatprep.subr.mxu0 0.0
        %240 = vmatpush1.msra.mxu0 0.0
        %241 = vmatprep.subr.mxu0 0.0
        %242 = vmatpush1.msra.mxu0 %v209
        %243 = vmatprep.subr.mxu0 0.0
        %244 = vmatpush2.msra.mxu0 0.0
        %245 = vmatprep.subr.mxu0 0.0
        %246 = vmatpush2.msra.mxu0 0.0
        %247 = vmatprep.subr.mxu0 0.0
        %248 = vmatpush2.msra.mxu0 0.0
        %249 = vmatprep.subr.mxu0 0.0
        %250 = vmatpush2.msra.mxu0 0.0
        %251 = vmatprep.subr.mxu0 0.0
        %252 = vmatpush2.msra.mxu0 0.0
        %253 = vmatprep.subr.mxu0 0.0
        %254 = vmatpush2.msra.mxu0 0.0
        %255 = vmatprep.subr.mxu0 0.0
        %256 = vmatpush2.msra.mxu0 0.0
        %257 = vmatprep.subr.mxu0 0.0
        %258 = vmatpush2.msra.mxu0 0.0
        %259 = vmatprep.subr.mxu0 0.0
        %260 = vmatpush2.msra.mxu0 0.0
        %261 = vmatprep.subr.mxu0 0.0
        %262 = vmatpush2.msra.mxu0 0.0
        %263 = vmatprep.subr.mxu0 0.0
        %264 = vmatpush2.msra.mxu0 0.0
        %265 = vmatprep.subr.mxu0 0.0
        %266 = vmatpush2.msra.mxu0 0.0
        %267 = vmatprep.subr.mxu0 0.0
        %268 = vmatpush2.msra.mxu0 0.0
        %269 = vmatprep.subr.mxu0 0.0
        %270 = vmatpush2.msra.mxu0 0.0
        %271 = vmatprep.subr.mxu0 0.0
        %272 = vmatpush2.msra.mxu0 0.0
        %273 = vmatprep.subr.mxu0 0.0
        %274 = vmatpush2.msra.mxu0 0.0
        %275 = vmatprep.mubr.f32.mxu0 0.0
        %276 = vmatmul.mubr.f32.gmra.mxu0 %v205
        %v277 = vpop.f32.mrf.mxu0
        %v278 = vadd.f32 0.0, %v277
        %v279 = vpop.f32.mrf.mxu0
        %280 = vdwg.mxu0
        %v282 = vsel %vm203, %v198, 0
        %v285 = vsel %vm207, %v200, 0
        %287 = vmatprep.subr.mxu0 0.0
        %288 = vmatpush1.msra.mxu0 0.0
        %289 = vmatprep.subr.mxu0 0.0
        %290 = vmatpush1.msra.mxu0 0.0
        %291 = vmatprep.subr.mxu0 0.0
        %292 = vmatpush1.msra.mxu0 0.0
        %293 = vmatprep.subr.mxu0 0.0
        %294 = vmatpush1.msra.mxu0 0.0
        %295 = vmatprep.subr.mxu0 0.0
        %296 = vmatpush1.msra.mxu0 0.0
        %297 = vmatprep.subr.mxu0 0.0
        %298 = vmatpush1.msra.mxu0 0.0
        %299 = vmatprep.subr.mxu0 0.0
        %300 = vmatpush1.msra.mxu0 0.0
        %301 = vmatprep.subr.mxu0 0.0
        %302 = vmatpush1.msra.mxu0 0.0
        %303 = vmatprep.subr.mxu0 0.0
        %304 = vmatpush1.msra.mxu0 0.0
        %305 = vmatprep.subr.mxu0 0.0
        %306 = vmatpush1.msra.mxu0 0.0
        %307 = vmatprep.subr.mxu0 0.0
        %308 = vmatpush1.msra.mxu0 0.0
        %309 = vmatprep.subr.mxu0 0.0
        %310 = vmatpush1.msra.mxu0 0.0
        %311 = vmatprep.subr.mxu0 0.0
        %312 = vmatpush1.msra.mxu0 0.0
        %313 = vmatprep.subr.mxu0 0.0
        %314 = vmatpush1.msra.mxu0 0.0
        %315 = vmatprep.subr.mxu0 0.0
        %316 = vmatpush1.msra.mxu0 0.0
        %317 = vmatprep.subr.mxu0 0.0
        %318 = vmatpush1.msra.mxu0 %v285
        %319 = vmatprep.subr.mxu0 0.0
        %320 = vmatpush2.msra.mxu0 0.0
        %321 = vmatprep.subr.mxu0 0.0
        %322 = vmatpush2.msra.mxu0 0.0
        %323 = vmatprep.subr.mxu0 0.0
        %324 = vmatpush2.msra.mxu0 0.0
        %325 = vmatprep.subr.mxu0 0.0
        %326 = vmatpush2.msra.mxu0 0.0
        %327 = vmatprep.subr.mxu0 0.0
        %328 = vmatpush2.msra.mxu0 0.0
        %329 = vmatprep.subr.mxu0 0.0
        %330 = vmatpush2.msra.mxu0 0.0
        %331 = vmatprep.subr.mxu0 0.0
        %332 = vmatpush2.msra.mxu0 0.0
        %333 = vmatprep.subr.mxu0 0.0
        %334 = vmatpush2.msra.mxu0 0.0
        %335 = vmatprep.subr.mxu0 0.0
        %336 = vmatpush2.msra.mxu0 0.0
        %337 = vmatprep.subr.mxu0 0.0
        %338 = vmatpush2.msra.mxu0 0.0
        %339 = vmatprep.subr.mxu0 0.0
        %340 = vmatpush2.msra.mxu0 0.0
        %341 = vmatprep.subr.mxu0 0.0
        %342 = vmatpush2.msra.mxu0 0.0
        %343 = vmatprep.subr.mxu0 0.0
        %344 = vmatpush2.msra.mxu0 0.0
        %345 = vmatprep.subr.mxu0 0.0
        %346 = vmatpush2.msra.mxu0 0.0
        %347 = vmatprep.subr.mxu0 0.0
        %348 = vmatpush2.msra.mxu0 0.0
        %349 = vmatprep.subr.mxu0 0.0
        %350 = vmatpush2.msra.mxu0 0.0
        %351 = vmatprep.mubr.f32.mxu0 0.0
        %352 = vmatmul.mubr.f32.gmra.mxu0 %v282
        %v353 = vpop.f32.mrf.mxu0
        %v354 = vadd.f32 %v278, %v353
        %v355 = vpop.f32.mrf.mxu0
        %356 = vdwg.mxu0
        %s357 = scalar_lea.vmem %s196, 8
        %v358 = vld [vmem:[%s357] sm:$0xf]
        %v360 = vsel %vm203, %v199, 0
        %v363 = vsel %vm207, %v358, 0
        %365 = vmatprep.subr.mxu0 0.0
        %366 = vmatpush1.msra.mxu0 0.0
        %367 = vmatprep.subr.mxu0 0.0
        %368 = vmatpush1.msra.mxu0 0.0
        %369 = vmatprep.subr.mxu0 0.0
        %370 = vmatpush1.msra.mxu0 0.0
        %371 = vmatprep.subr.mxu0 0.0
        %372 = vmatpush1.msra.mxu0 0.0
        %373 = vmatprep.subr.mxu0 0.0
        %374 = vmatpush1.msra.mxu0 0.0
        %375 = vmatprep.subr.mxu0 0.0
        %376 = vmatpush1.msra.mxu0 0.0
        %377 = vmatprep.subr.mxu0 0.0
        %378 = vmatpush1.msra.mxu0 0.0
        %379 = vmatprep.subr.mxu0 0.0
        %380 = vmatpush1.msra.mxu0 0.0
        %381 = vmatprep.subr.mxu0 0.0
        %382 = vmatpush1.msra.mxu0 0.0
        %383 = vmatprep.subr.mxu0 0.0
        %384 = vmatpush1.msra.mxu0 0.0
        %385 = vmatprep.subr.mxu0 0.0
        %386 = vmatpush1.msra.mxu0 0.0
        %387 = vmatprep.subr.mxu0 0.0
        %388 = vmatpush1.msra.mxu0 0.0
        %389 = vmatprep.subr.mxu0 0.0
        %390 = vmatpush1.msra.mxu0 0.0
        %391 = vmatprep.subr.mxu0 0.0
        %392 = vmatpush1.msra.mxu0 0.0
        %393 = vmatprep.subr.mxu0 0.0
        %394 = vmatpush1.msra.mxu0 0.0
        %395 = vmatprep.subr.mxu0 0.0
        %396 = vmatpush1.msra.mxu0 %v363
        %397 = vmatprep.subr.mxu0 0.0
        %398 = vmatpush2.msra.mxu0 0.0
        %399 = vmatprep.subr.mxu0 0.0
        %400 = vmatpush2.msra.mxu0 0.0
        %401 = vmatprep.subr.mxu0 0.0
        %402 = vmatpush2.msra.mxu0 0.0
        %403 = vmatprep.subr.mxu0 0.0
        %404 = vmatpush2.msra.mxu0 0.0
        %405 = vmatprep.subr.mxu0 0.0
        %406 = vmatpush2.msra.mxu0 0.0
        %407 = vmatprep.subr.mxu0 0.0
        %408 = vmatpush2.msra.mxu0 0.0
        %409 = vmatprep.subr.mxu0 0.0
        %410 = vmatpush2.msra.mxu0 0.0
        %411 = vmatprep.subr.mxu0 0.0
        %412 = vmatpush2.msra.mxu0 0.0
        %413 = vmatprep.subr.mxu0 0.0
        %414 = vmatpush2.msra.mxu0 0.0
        %415 = vmatprep.subr.mxu0 0.0
        %416 = vmatpush2.msra.mxu0 0.0
        %417 = vmatprep.subr.mxu0 0.0
        %418 = vmatpush2.msra.mxu0 0.0
        %419 = vmatprep.subr.mxu0 0.0
        %420 = vmatpush2.msra.mxu0 0.0
        %421 = vmatprep.subr.mxu0 0.0
        %422 = vmatpush2.msra.mxu0 0.0
        %423 = vmatprep.subr.mxu0 0.0
        %424 = vmatpush2.msra.mxu0 0.0
        %425 = vmatprep.subr.mxu0 0.0
        %426 = vmatpush2.msra.mxu0 0.0
        %427 = vmatprep.subr.mxu0 0.0
        %428 = vmatpush2.msra.mxu0 0.0
        %429 = vmatprep.mubr.f32.mxu0 0.0
        %430 = vmatmul.mubr.f32.gmra.mxu0 %v360
        %v431 = vpop.f32.mrf.mxu0
        %v432 = vadd.f32 0.0, %v431
        %v433 = vpop.f32.mrf.mxu0
        %434 = vdwg.mxu0
        %v435 = vadd.f32 %v354, %v432
        %vm436 = vcmask 261120
        %437 = vst.msk [vmem:[%s188] sm:$0xff] %vm436, %v435
        %s438 = sand.u32 %s112, 1
        %s439 = scalar_lea.sflag [#allocation3], %s438
        %s440 = sand.u32 %s112, 1
        %s441 = smul.addr %s440, 8
        %s442 = scalar_lea.vmem [#allocation2], %s441
        // Predicated region
        $region33: #{token_embedding_forward.1} parent=31 // pred_check
          %p443 = pneg %p122
        $region34: #{token_embedding_forward.1} parent=31 // pred_check_branch
          %445 = sbr.rel (%p443) target = $region36
        $region35: #{token_embedding_forward.1} parent=31 // pred_region
          %s447 = ssub.s32 128, 128
          %448 = vsyncadd %s439, %s447
          %s449 = sadd.s32 %s22, %s21
          %s450 = smul.addr %s449, 128
          %s451 = scalar_lea.hbm %s3, %s450
          %s453 = sshll.u32 %s442, 4
          %s454 = int_to_ptr.vmem [resolvable:$true] %s453
          %456 = dma.vmem_to_hbm [thread:$0]  %s454, 128, %s451, %s439
        $region36: #{token_embedding_forward.1} parent=31 // pred_fallthru
          _
      $region32: #{token_embedding_forward.1} parent=5 // pred_fallthru
        _
      %p457 = scmp.le.s32.totalorder 2, %s12
      // Predicated region
      $region37: #{token_embedding_forward.1} parent=5 // pred_check
        %p458 = pneg %p457
      $region38: #{token_embedding_forward.1} parent=5 // pred_check_branch
        %460 = sbr.rel (%p458) target = $region40
      $region39: #{token_embedding_forward.1} parent=5 // pred_region
        %s461 = ssub.s32 %s12, 2
        // Predicated region
        $region41: #{token_embedding_forward.1} parent=39 // pred_check
          %p462 = pneg %p128
        $region42: #{token_embedding_forward.1} parent=39 // pred_check_branch
          %464 = sbr.rel (%p462) target = $region44
        $region43: #{token_embedding_forward.1} parent=39 // pred_region
          %s465 = sand.u32 %s113, 1
          %s466 = scalar_lea.sflag [#allocation3], %s465
          %s467 = sand.u32 %s113, 1
          %s468 = smul.addr %s467, 8
          %s469 = scalar_lea.vmem [#allocation2], %s468
          %470 = dma.done %s466, 128
        $region44: #{token_embedding_forward.1} parent=39 // pred_fallthru
          _
      $region40: #{token_embedding_forward.1} parent=5 // pred_fallthru
        _
    $region6: #{token_embedding_forward.1} parent=1 // loop_footer
      %s16 = sadd.s32 1, %s12
    $region7: #{token_embedding_forward.1} parent=1 // loop_footer_branch
      %11 = sbr.rel target = $region3
    $region8: #{token_embedding_forward.1} parent=1 // loop_exit
      _
    %471 = vsyncpa [#allocation3], 1
    %s472 = scalar_lea.sflag [#allocation3], 1
    %473 = vsyncpa %s472, 1

</llo_original>
